<compile_context>
chip_gen: v6e
topology: v6e:2x2x1
jax: 0.10.0
libtpu: 0.0.40
codegen_flags: <defaults>
</compile_context>

<pallas_src>
import functools

import jax
import jax.numpy as jnp
from jax.experimental import pallas as pl
from jax.experimental.pallas import tpu as pltpu


def _mlp3_kernel(x_ref, w1t_ref, b1_ref, dwk_ref, w2t_ref, b2_ref, o_ref, *,
                 img_w, pad):
    # Block shapes:
    #   x_ref   : (nb, Cin,  HW)   nb whole images, channels on sublanes
    #   w1t_ref : (Chid, Cin)      fc1 weight, transposed
    #   b1_ref  : (Chid, 1)        fc1 bias (column)
    #   dwk_ref : (Chid, 9)        depthwise 3x3 taps, tap-major (kh*3 + kw)
    #   w2t_ref : (Cout, Chid)     fc2 weight with BatchNorm scale folded in
    #   b2_ref  : (Cout, 1)        fc2 bias with dw-bias / BN folded in
    #   o_ref   : (nb, Cout, HW)
    nb, _, hw = x_ref.shape
    chid = w1t_ref.shape[0]

    w1t = w1t_ref[...]
    b1 = b1_ref[...]
    dwk = dwk_ref[...]
    w2t = w2t_ref[...]
    b2 = b2_ref[...]

    # Column-validity masks from the lane index (computed once per grid step,
    # shared by every image in the block).  col(p) = p mod W, computed exactly
    # with an f32 divide + floor (p and W are small exact integers in f32).
    pos = jax.lax.broadcasted_iota(jnp.int32, (1, hw), 1).astype(jnp.float32)
    col = pos - img_w * jnp.floor(pos / img_w)
    m_left = jnp.where(col >= 0.5, 1.0, 0.0).astype(jnp.float32)            # has left neighbor
    m_right = jnp.where(col <= img_w - 1.5, 1.0, 0.0).astype(jnp.float32)   # has right neighbor
    col_mask = {-1: m_left, 0: None, 1: m_right}

    zpad = jnp.zeros((chid, pad), jnp.float32)   # 128-aligned zero halo

    for n in range(nb):                 # static unroll over whole images
        x_n = x_ref[n]                                          # (Cin, HW)

        # ---- fc1 (1x1 conv) on the MXU + ReLU ---------------------------
        h = jnp.dot(w1t, x_n, preferred_element_type=jnp.float32) + b1
        h = jnp.maximum(h, 0.0)
        # Dropout(p=0.0) == identity.

        # ---- depthwise 3x3 conv (padding=1) -----------------------------
        # Zero-pad the flattened row axis (pad is 128-aligned so the concat
        # is tile-aligned); top/bottom borders read the zero halo,
        # left/right borders are zeroed by the column masks.
        hp = jnp.concatenate([zpad, h, zpad], axis=1)   # (Chid, HW + 2*pad)
        acc = h * dwk[:, 4:5]                           # center tap (dh=dw=0)
        for dh in (-1, 0, 1):
            for dw in (-1, 0, 1):
                if dh == 0 and dw == 0:
                    continue
                tap = (dh + 1) * 3 + (dw + 1)
                off = pad + dh * img_w + dw
                v = hp[:, off:off + hw]                 # = h[p + dh*W + dw]
                m = col_mask[dw]
                if m is not None:
                    v = v * m
                acc = acc + v * dwk[:, tap:tap + 1]
        # Depthwise bias + BatchNorm(eval) are folded into w2t/b2 (wrapper).

        # ---- fc2 (1x1 conv, BN-folded) on the MXU ------------------------
        out = jnp.dot(w2t, acc, preferred_element_type=jnp.float32) + b2
        # Final Dropout(p=0.0) == identity.
        o_ref[n] = out.astype(o_ref.dtype)


def _pick_images_per_block(n, hw, *, max_block_px=8192, min_block_px=2048,
                           max_images=32):
    """Whole images per grid block (nb divides N).

    Large blocks amortize per-grid-step overhead; >= 2 grid steps are kept
    only when each block stays >= min_block_px so v7x's two TensorCores both
    get work without falling back into per-step-overhead territory.
    """
    divisors = [d for d in range(1, n + 1) if n % d == 0]
    fits = [d for d in divisors if d * hw <= max_block_px and d <= max_images]
    if not fits:
        fits = [1]
    nb = max(fits)
    if n // nb < 2:
        split = [d for d in fits if n // d >= 2 and d * hw >= min_block_px]
        if split:
            nb = max(split)
    return nb


def mlp3_forward(x_nchw, params):
    """x_nchw: (N, Cin, H, W) float32 (PyTorch layout). Returns (N, Cout, H, W)."""
    N, Cin, H, W = x_nchw.shape
    w1, b1, dwk, dwb, bns, bnb, w2, b2 = params
    Chid = w1.shape[1]
    Cout = w2.shape[1]
    HW = H * W

    # Free, contiguous reshapes only -- no transpose round trips through HBM.
    x3d = x_nchw.reshape(N, Cin, HW)

    nb = _pick_images_per_block(N, HW)
    grid = (N // nb,)

    # Parameter packing / folding (host side, tiny):
    w1t = w1.T                                        # (Chid, Cin)
    b1c = b1.reshape(Chid, 1)                         # (Chid, 1)
    dwk9 = dwk.transpose(2, 0, 1).reshape(Chid, 9)    # tap-major per channel
    w2t = (bns.reshape(Chid, 1) * w2).T               # (Cout, Chid) = (diag(bns)@w2)^T
    b2c = (b2[0] + (dwb[0] * bns[0] + bnb[0]) @ w2).reshape(Cout, 1)

    pad = ((W + 1 + 127) // 128) * 128                # 128-aligned halo pad

    kernel = functools.partial(_mlp3_kernel, img_w=W, pad=pad)

    out3d = pl.pallas_call(
        kernel,
        out_shape=jax.ShapeDtypeStruct((N, Cout, HW), jnp.float32),
        grid=grid,
        in_specs=[
            pl.BlockSpec((nb, Cin, HW), lambda g: (g, 0, 0)),   # x block
            pl.BlockSpec((Chid, Cin), lambda g: (0, 0)),        # w1^T
            pl.BlockSpec((Chid, 1), lambda g: (0, 0)),          # b1
            pl.BlockSpec((Chid, 9), lambda g: (0, 0)),          # depthwise taps
            pl.BlockSpec((Cout, Chid), lambda g: (0, 0)),       # folded w2^T
            pl.BlockSpec((Cout, 1), lambda g: (0, 0)),          # folded b2
        ],
        out_specs=pl.BlockSpec((nb, Cout, HW), lambda g: (g, 0, 0)),
        compiler_params=pltpu.CompilerParams(
            dimension_semantics=("parallel",)),
    )(x3d, w1t, b1c, dwk9, w2t, b2c)

    return out3d.reshape(N, Cout, H, W)


def mlp3_reference(x_nchw, params):
    """Plain-JAX NCHW reference for correctness checking."""
    w1, b1, dwk, dwb, bns, bnb, w2, b2 = params
    N, Cin, H, W = x_nchw.shape
    h = jnp.einsum("nchw,cd->ndhw", x_nchw, w1) + b1[0][None, :, None, None]
    h = jnp.maximum(h, 0.0)
    hp = jnp.pad(h, ((0, 0), (0, 0), (1, 1), (1, 1)))
    acc = jnp.zeros_like(h) + dwb[0][None, :, None, None]
    for kh in range(3):
        for kw in range(3):
            acc = acc + hp[:, :, kh:kh + H, kw:kw + W] * dwk[kh, kw, :][None, :, None, None]
    y = acc * bns[0][None, :, None, None] + bnb[0][None, :, None, None]
    return jnp.einsum("ndhw,de->nehw", y, w2) + b2[0][None, :, None, None]


def make_params(key, in_features, hidden_features, out_features):
    """Deterministic parameter init matching the PyTorch module's shapes."""
    ks = jax.random.split(key, 8)
    scale = 0.1
    w1 = scale * jax.random.normal(ks[0], (in_features, hidden_features), jnp.float32)
    b1 = scale * jax.random.normal(ks[1], (1, hidden_features), jnp.float32)
    dwk = scale * jax.random.normal(ks[2], (3, 3, hidden_features), jnp.float32)
    dwb = scale * jax.random.normal(ks[3], (1, hidden_features), jnp.float32)
    # BatchNorm2d (eval): gamma, beta, running_mean, running_var -> scale/bias
    gamma = 1.0 + 0.05 * jax.random.normal(ks[4], (hidden_features,), jnp.float32)
    beta = 0.05 * jax.random.normal(ks[5], (hidden_features,), jnp.float32)
    running_mean = 0.02 * jnp.arange(hidden_features, dtype=jnp.float32)
    running_var = 1.0 + 0.01 * jnp.arange(hidden_features, dtype=jnp.float32)
    eps = 1e-5
    bn_scale = (gamma / jnp.sqrt(running_var + eps)).reshape(1, hidden_features)
    bn_bias = (beta - running_mean * bn_scale[0]).reshape(1, hidden_features)
    w2 = scale * jax.random.normal(ks[6], (hidden_features, out_features), jnp.float32)
    b2 = scale * jax.random.normal(ks[7], (1, out_features), jnp.float32)
    return (w1, b1, dwk, dwb, bn_scale, bn_bias, w2, b2)


if __name__ == "__main__":
    # Small shapes: N=2, C_in=4, H=W=16, hidden=8, out=4 (out defaults to in).
    N, Cin, H, W = 2, 4, 16, 16
    Chid, Cout = 8, 4

    key = jax.random.PRNGKey(0)
    kx, kp = jax.random.split(key)
    x_nchw = jax.random.normal(kx, (N, Cin, H, W), jnp.float32)   # PyTorch NCHW
    params = make_params(kp, Cin, Chid, Cout)

    out = mlp3_forward(x_nchw, params)
    out = jax.block_until_ready(out)

    ref = mlp3_reference(x_nchw, params)
    assert out.shape == (N, Cout, H, W)
    assert jnp.allclose(out, ref, atol=1e-4, rtol=1e-4), "mismatch vs reference"

    print("KERNEL_OK")
</pallas_src>

<mosaic_0001>
module attributes {stable_mosaic.version = 11 : i64} {
  func.func @_mlp3_kernel(%arg0: i32, %arg1: memref<2x4x256xf32, #tpu.memory_space<vmem>>, %arg2: memref<8x4xf32, #tpu.memory_space<vmem>>, %arg3: memref<8x1xf32, #tpu.memory_space<vmem>>, %arg4: memref<8x9xf32, #tpu.memory_space<vmem>>, %arg5: memref<4x8xf32, #tpu.memory_space<vmem>>, %arg6: memref<4x1xf32, #tpu.memory_space<vmem>>, %arg7: memref<2x4x256xf32, #tpu.memory_space<vmem>>) attributes {dimension_semantics = [#tpu.dimension_semantics<parallel>], iteration_bounds = array<i64: 1>, scalar_prefetch = 0 : i64, scratch_operands = 0 : i64, tpu.core_type = #tpu.core_type<tc>, window_params = [{transform_indices = @transform_0, window_bounds = array<i64: 2, 4, 256>}, {pipeline_mode = #tpu.pipeline_mode<synchronous>, transform_indices = @transform_1, window_bounds = array<i64: 8, 4>}, {pipeline_mode = #tpu.pipeline_mode<synchronous>, transform_indices = @transform_2, window_bounds = array<i64: 8, 1>}, {pipeline_mode = #tpu.pipeline_mode<synchronous>, transform_indices = @transform_3, window_bounds = array<i64: 8, 9>}, {pipeline_mode = #tpu.pipeline_mode<synchronous>, transform_indices = @transform_4, window_bounds = array<i64: 4, 8>}, {pipeline_mode = #tpu.pipeline_mode<synchronous>, transform_indices = @transform_5, window_bounds = array<i64: 4, 1>}, {transform_indices = @transform_6, window_bounds = array<i64: 2, 4, 256>}]} {
    %c0 = arith.constant 0 : index
    %c0_0 = arith.constant 0 : index
    %0 = vector.load %arg2[%c0, %c0_0] : memref<8x4xf32, #tpu.memory_space<vmem>>, vector<8x4xf32>
    %c0_1 = arith.constant 0 : index
    %c0_2 = arith.constant 0 : index
    %1 = vector.load %arg3[%c0_1, %c0_2] : memref<8x1xf32, #tpu.memory_space<vmem>>, vector<8x1xf32>
    %c0_3 = arith.constant 0 : index
    %c0_4 = arith.constant 0 : index
    %2 = vector.load %arg4[%c0_3, %c0_4] : memref<8x9xf32, #tpu.memory_space<vmem>>, vector<8x9xf32>
    %c0_5 = arith.constant 0 : index
    %c0_6 = arith.constant 0 : index
    %3 = vector.load %arg5[%c0_5, %c0_6] : memref<4x8xf32, #tpu.memory_space<vmem>>, vector<4x8xf32>
    %c0_7 = arith.constant 0 : index
    %c0_8 = arith.constant 0 : index
    %4 = vector.load %arg6[%c0_7, %c0_8] : memref<4x1xf32, #tpu.memory_space<vmem>>, vector<4x1xf32>
    %5 = tpu.iota {dimensions = array<i32: 1>} : vector<1x256xi32>
    %6 = arith.sitofp %5 : vector<1x256xi32> to vector<1x256xf32>
    %cst = arith.constant 1.600000e+01 : f32
    %7 = vector.broadcast %cst : f32 to vector<1x256xf32>
    %8 = arith.divf %6, %7 : vector<1x256xf32>
    %9 = math.floor %8 : vector<1x256xf32>
    %cst_9 = arith.constant 1.600000e+01 : f32
    %10 = vector.broadcast %cst_9 : f32 to vector<1x256xf32>
    %11 = arith.mulf %10, %9 : vector<1x256xf32>
    %12 = arith.subf %6, %11 : vector<1x256xf32>
    %cst_10 = arith.constant 5.000000e-01 : f32
    %13 = vector.broadcast %cst_10 : f32 to vector<1x256xf32>
    %14 = arith.cmpf oge, %12, %13 : vector<1x256xf32>
    %cst_11 = arith.constant 1.000000e+00 : f32
    %cst_12 = arith.constant 0.000000e+00 : f32
    %15 = vector.broadcast %cst_11 : f32 to vector<1x256xf32>
    %16 = vector.broadcast %cst_12 : f32 to vector<1x256xf32>
    %17 = arith.select %14, %15, %16 : vector<1x256xi1>, vector<1x256xf32>
    %cst_13 = arith.constant 1.450000e+01 : f32
    %18 = vector.broadcast %cst_13 : f32 to vector<1x256xf32>
    %19 = arith.cmpf ole, %12, %18 : vector<1x256xf32>
    %cst_14 = arith.constant 1.000000e+00 : f32
    %cst_15 = arith.constant 0.000000e+00 : f32
    %20 = vector.broadcast %cst_14 : f32 to vector<1x256xf32>
    %21 = vector.broadcast %cst_15 : f32 to vector<1x256xf32>
    %22 = arith.select %19, %20, %21 : vector<1x256xi1>, vector<1x256xf32>
    %cst_16 = arith.constant 0.000000e+00 : f32
    %23 = vector.broadcast %cst_16 : f32 to vector<8x128xf32>
    %c0_17 = arith.constant 0 : index
    %c0_18 = arith.constant 0 : index
    %c0_19 = arith.constant 0 : index
    %24 = vector.load %arg1[%c0_17, %c0_18, %c0_19] : memref<2x4x256xf32, #tpu.memory_space<vmem>>, vector<1x4x256xf32>
    %25 = vector.shape_cast %24 : vector<1x4x256xf32> to vector<4x256xf32>
    %cst_20 = arith.constant dense<0.000000e+00> : vector<8x256xf32>
    %26 = tpu.matmul %0, %25, %cst_20 {dimension_numbers = #tpu.dot_dimension_numbers<[1], [0], [0], [1], [0, 0, 1, 1], [], []>} : vector<8x4xf32>, vector<4x256xf32>, vector<8x256xf32> -> vector<8x256xf32>
    %27 = vector.broadcast %1 : vector<8x1xf32> to vector<8x256xf32>
    %28 = arith.addf %26, %27 : vector<8x256xf32>
    %cst_21 = arith.constant 0.000000e+00 : f32
    %29 = vector.broadcast %cst_21 : f32 to vector<8x256xf32>
    %30 = arith.maximumf %28, %29 : vector<8x256xf32>
    %31 = tpu.concatenate %23, %30, %23 in 1 : vector<8x128xf32>, vector<8x256xf32>, vector<8x128xf32> -> vector<8x512xf32>
    %32 = vector.extract_strided_slice %2 {offsets = [0, 4], sizes = [8, 1], strides = [1, 1]} : vector<8x9xf32> to vector<8x1xf32>
    %33 = vector.broadcast %32 : vector<8x1xf32> to vector<8x256xf32>
    %34 = arith.mulf %30, %33 : vector<8x256xf32>
    %35 = vector.extract_strided_slice %31 {offsets = [0, 111], sizes = [8, 256], strides = [1, 1]} : vector<8x512xf32> to vector<8x256xf32>
    %36 = vector.broadcast %17 : vector<1x256xf32> to vector<8x256xf32>
    %37 = arith.mulf %35, %36 : vector<8x256xf32>
    %38 = vector.extract_strided_slice %2 {offsets = [0, 0], sizes = [8, 1], strides = [1, 1]} : vector<8x9xf32> to vector<8x1xf32>
    %39 = vector.broadcast %38 : vector<8x1xf32> to vector<8x256xf32>
    %40 = arith.mulf %37, %39 : vector<8x256xf32>
    %41 = arith.addf %34, %40 : vector<8x256xf32>
    %42 = vector.extract_strided_slice %31 {offsets = [0, 112], sizes = [8, 256], strides = [1, 1]} : vector<8x512xf32> to vector<8x256xf32>
    %43 = vector.extract_strided_slice %2 {offsets = [0, 1], sizes = [8, 1], strides = [1, 1]} : vector<8x9xf32> to vector<8x1xf32>
    %44 = vector.broadcast %43 : vector<8x1xf32> to vector<8x256xf32>
    %45 = arith.mulf %42, %44 : vector<8x256xf32>
    %46 = arith.addf %41, %45 : vector<8x256xf32>
    %47 = vector.extract_strided_slice %31 {offsets = [0, 113], sizes = [8, 256], strides = [1, 1]} : vector<8x512xf32> to vector<8x256xf32>
    %48 = vector.broadcast %22 : vector<1x256xf32> to vector<8x256xf32>
    %49 = arith.mulf %47, %48 : vector<8x256xf32>
    %50 = vector.extract_strided_slice %2 {offsets = [0, 2], sizes = [8, 1], strides = [1, 1]} : vector<8x9xf32> to vector<8x1xf32>
    %51 = vector.broadcast %50 : vector<8x1xf32> to vector<8x256xf32>
    %52 = arith.mulf %49, %51 : vector<8x256xf32>
    %53 = arith.addf %46, %52 : vector<8x256xf32>
    %54 = vector.extract_strided_slice %31 {offsets = [0, 127], sizes = [8, 256], strides = [1, 1]} : vector<8x512xf32> to vector<8x256xf32>
    %55 = vector.broadcast %17 : vector<1x256xf32> to vector<8x256xf32>
    %56 = arith.mulf %54, %55 : vector<8x256xf32>
    %57 = vector.extract_strided_slice %2 {offsets = [0, 3], sizes = [8, 1], strides = [1, 1]} : vector<8x9xf32> to vector<8x1xf32>
    %58 = vector.broadcast %57 : vector<8x1xf32> to vector<8x256xf32>
    %59 = arith.mulf %56, %58 : vector<8x256xf32>
    %60 = arith.addf %53, %59 : vector<8x256xf32>
    %61 = vector.extract_strided_slice %31 {offsets = [0, 129], sizes = [8, 256], strides = [1, 1]} : vector<8x512xf32> to vector<8x256xf32>
    %62 = vector.broadcast %22 : vector<1x256xf32> to vector<8x256xf32>
    %63 = arith.mulf %61, %62 : vector<8x256xf32>
    %64 = vector.extract_strided_slice %2 {offsets = [0, 5], sizes = [8, 1], strides = [1, 1]} : vector<8x9xf32> to vector<8x1xf32>
    %65 = vector.broadcast %64 : vector<8x1xf32> to vector<8x256xf32>
    %66 = arith.mulf %63, %65 : vector<8x256xf32>
    %67 = arith.addf %60, %66 : vector<8x256xf32>
    %68 = vector.extract_strided_slice %31 {offsets = [0, 143], sizes = [8, 256], strides = [1, 1]} : vector<8x512xf32> to vector<8x256xf32>
    %69 = vector.broadcast %17 : vector<1x256xf32> to vector<8x256xf32>
    %70 = arith.mulf %68, %69 : vector<8x256xf32>
    %71 = vector.extract_strided_slice %2 {offsets = [0, 6], sizes = [8, 1], strides = [1, 1]} : vector<8x9xf32> to vector<8x1xf32>
    %72 = vector.broadcast %71 : vector<8x1xf32> to vector<8x256xf32>
    %73 = arith.mulf %70, %72 : vector<8x256xf32>
    %74 = arith.addf %67, %73 : vector<8x256xf32>
    %75 = vector.extract_strided_slice %31 {offsets = [0, 144], sizes = [8, 256], strides = [1, 1]} : vector<8x512xf32> to vector<8x256xf32>
    %76 = vector.extract_strided_slice %2 {offsets = [0, 7], sizes = [8, 1], strides = [1, 1]} : vector<8x9xf32> to vector<8x1xf32>
    %77 = vector.broadcast %76 : vector<8x1xf32> to vector<8x256xf32>
    %78 = arith.mulf %75, %77 : vector<8x256xf32>
    %79 = arith.addf %74, %78 : vector<8x256xf32>
    %80 = vector.extract_strided_slice %31 {offsets = [0, 145], sizes = [8, 256], strides = [1, 1]} : vector<8x512xf32> to vector<8x256xf32>
    %81 = vector.broadcast %22 : vector<1x256xf32> to vector<8x256xf32>
    %82 = arith.mulf %80, %81 : vector<8x256xf32>
    %83 = vector.extract_strided_slice %2 {offsets = [0, 8], sizes = [8, 1], strides = [1, 1]} : vector<8x9xf32> to vector<8x1xf32>
    %84 = vector.broadcast %83 : vector<8x1xf32> to vector<8x256xf32>
    %85 = arith.mulf %82, %84 : vector<8x256xf32>
    %86 = arith.addf %79, %85 : vector<8x256xf32>
    %cst_22 = arith.constant dense<0.000000e+00> : vector<4x256xf32>
    %87 = tpu.matmul %3, %86, %cst_22 {dimension_numbers = #tpu.dot_dimension_numbers<[1], [0], [0], [1], [0, 0, 1, 1], [], []>} : vector<4x8xf32>, vector<8x256xf32>, vector<4x256xf32> -> vector<4x256xf32>
    %88 = vector.broadcast %4 : vector<4x1xf32> to vector<4x256xf32>
    %89 = arith.addf %87, %88 : vector<4x256xf32>
    %c0_23 = arith.constant 0 : index
    %c0_24 = arith.constant 0 : index
    %c0_25 = arith.constant 0 : index
    %90 = vector.load %arg7[%c0_23, %c0_24, %c0_25] : memref<2x4x256xf32, #tpu.memory_space<vmem>>, vector<1x4x256xf32>
    %91 = vector.shape_cast %90 : vector<1x4x256xf32> to vector<4x256xf32>
    %92 = vector.shape_cast %89 : vector<4x256xf32> to vector<1x4x256xf32>
    tpu.vector_store %arg7[%c0_23, %c0_24, %c0_25], %92 {strides = array<i32>} : memref<2x4x256xf32, #tpu.memory_space<vmem>>, vector<1x4x256xf32>,
    %c1 = arith.constant 1 : index
    %c0_26 = arith.constant 0 : index
    %c0_27 = arith.constant 0 : index
    %93 = vector.load %arg1[%c1, %c0_26, %c0_27] : memref<2x4x256xf32, #tpu.memory_space<vmem>>, vector<1x4x256xf32>
    %94 = vector.shape_cast %93 : vector<1x4x256xf32> to vector<4x256xf32>
    %cst_28 = arith.constant dense<0.000000e+00> : vector<8x256xf32>
    %95 = tpu.matmul %0, %94, %cst_28 {dimension_numbers = #tpu.dot_dimension_numbers<[1], [0], [0], [1], [0, 0, 1, 1], [], []>} : vector<8x4xf32>, vector<4x256xf32>, vector<8x256xf32> -> vector<8x256xf32>
    %96 = vector.broadcast %1 : vector<8x1xf32> to vector<8x256xf32>
    %97 = arith.addf %95, %96 : vector<8x256xf32>
    %cst_29 = arith.constant 0.000000e+00 : f32
    %98 = vector.broadcast %cst_29 : f32 to vector<8x256xf32>
    %99 = arith.maximumf %97, %98 : vector<8x256xf32>
    %100 = tpu.concatenate %23, %99, %23 in 1 : vector<8x128xf32>, vector<8x256xf32>, vector<8x128xf32> -> vector<8x512xf32>
    %101 = vector.extract_strided_slice %2 {offsets = [0, 4], sizes = [8, 1], strides = [1, 1]} : vector<8x9xf32> to vector<8x1xf32>
    %102 = vector.broadcast %101 : vector<8x1xf32> to vector<8x256xf32>
    %103 = arith.mulf %99, %102 : vector<8x256xf32>
    %104 = vector.extract_strided_slice %100 {offsets = [0, 111], sizes = [8, 256], strides = [1, 1]} : vector<8x512xf32> to vector<8x256xf32>
    %105 = vector.broadcast %17 : vector<1x256xf32> to vector<8x256xf32>
    %106 = arith.mulf %104, %105 : vector<8x256xf32>
    %107 = vector.extract_strided_slice %2 {offsets = [0, 0], sizes = [8, 1], strides = [1, 1]} : vector<8x9xf32> to vector<8x1xf32>
    %108 = vector.broadcast %107 : vector<8x1xf32> to vector<8x256xf32>
    %109 = arith.mulf %106, %108 : vector<8x256xf32>
    %110 = arith.addf %103, %109 : vector<8x256xf32>
    %111 = vector.extract_strided_slice %100 {offsets = [0, 112], sizes = [8, 256], strides = [1, 1]} : vector<8x512xf32> to vector<8x256xf32>
    %112 = vector.extract_strided_slice %2 {offsets = [0, 1], sizes = [8, 1], strides = [1, 1]} : vector<8x9xf32> to vector<8x1xf32>
    %113 = vector.broadcast %112 : vector<8x1xf32> to vector<8x256xf32>
    %114 = arith.mulf %111, %113 : vector<8x256xf32>
    %115 = arith.addf %110, %114 : vector<8x256xf32>
    %116 = vector.extract_strided_slice %100 {offsets = [0, 113], sizes = [8, 256], strides = [1, 1]} : vector<8x512xf32> to vector<8x256xf32>
    %117 = vector.broadcast %22 : vector<1x256xf32> to vector<8x256xf32>
    %118 = arith.mulf %116, %117 : vector<8x256xf32>
    %119 = vector.extract_strided_slice %2 {offsets = [0, 2], sizes = [8, 1], strides = [1, 1]} : vector<8x9xf32> to vector<8x1xf32>
    %120 = vector.broadcast %119 : vector<8x1xf32> to vector<8x256xf32>
    %121 = arith.mulf %118, %120 : vector<8x256xf32>
    %122 = arith.addf %115, %121 : vector<8x256xf32>
    %123 = vector.extract_strided_slice %100 {offsets = [0, 127], sizes = [8, 256], strides = [1, 1]} : vector<8x512xf32> to vector<8x256xf32>
    %124 = vector.broadcast %17 : vector<1x256xf32> to vector<8x256xf32>
    %125 = arith.mulf %123, %124 : vector<8x256xf32>
    %126 = vector.extract_strided_slice %2 {offsets = [0, 3], sizes = [8, 1], strides = [1, 1]} : vector<8x9xf32> to vector<8x1xf32>
    %127 = vector.broadcast %126 : vector<8x1xf32> to vector<8x256xf32>
    %128 = arith.mulf %125, %127 : vector<8x256xf32>
    %129 = arith.addf %122, %128 : vector<8x256xf32>
    %130 = vector.extract_strided_slice %100 {offsets = [0, 129], sizes = [8, 256], strides = [1, 1]} : vector<8x512xf32> to vector<8x256xf32>
    %131 = vector.broadcast %22 : vector<1x256xf32> to vector<8x256xf32>
    %132 = arith.mulf %130, %131 : vector<8x256xf32>
    %133 = vector.extract_strided_slice %2 {offsets = [0, 5], sizes = [8, 1], strides = [1, 1]} : vector<8x9xf32> to vector<8x1xf32>
    %134 = vector.broadcast %133 : vector<8x1xf32> to vector<8x256xf32>
    %135 = arith.mulf %132, %134 : vector<8x256xf32>
    %136 = arith.addf %129, %135 : vector<8x256xf32>
    %137 = vector.extract_strided_slice %100 {offsets = [0, 143], sizes = [8, 256], strides = [1, 1]} : vector<8x512xf32> to vector<8x256xf32>
    %138 = vector.broadcast %17 : vector<1x256xf32> to vector<8x256xf32>
    %139 = arith.mulf %137, %138 : vector<8x256xf32>
    %140 = vector.extract_strided_slice %2 {offsets = [0, 6], sizes = [8, 1], strides = [1, 1]} : vector<8x9xf32> to vector<8x1xf32>
    %141 = vector.broadcast %140 : vector<8x1xf32> to vector<8x256xf32>
    %142 = arith.mulf %139, %141 : vector<8x256xf32>
    %143 = arith.addf %136, %142 : vector<8x256xf32>
    %144 = vector.extract_strided_slice %100 {offsets = [0, 144], sizes = [8, 256], strides = [1, 1]} : vector<8x512xf32> to vector<8x256xf32>
    %145 = vector.extract_strided_slice %2 {offsets = [0, 7], sizes = [8, 1], strides = [1, 1]} : vector<8x9xf32> to vector<8x1xf32>
    %146 = vector.broadcast %145 : vector<8x1xf32> to vector<8x256xf32>
    %147 = arith.mulf %144, %146 : vector<8x256xf32>
    %148 = arith.addf %143, %147 : vector<8x256xf32>
    %149 = vector.extract_strided_slice %100 {offsets = [0, 145], sizes = [8, 256], strides = [1, 1]} : vector<8x512xf32> to vector<8x256xf32>
    %150 = vector.broadcast %22 : vector<1x256xf32> to vector<8x256xf32>
    %151 = arith.mulf %149, %150 : vector<8x256xf32>
    %152 = vector.extract_strided_slice %2 {offsets = [0, 8], sizes = [8, 1], strides = [1, 1]} : vector<8x9xf32> to vector<8x1xf32>
    %153 = vector.broadcast %152 : vector<8x1xf32> to vector<8x256xf32>
    %154 = arith.mulf %151, %153 : vector<8x256xf32>
    %155 = arith.addf %148, %154 : vector<8x256xf32>
    %cst_30 = arith.constant dense<0.000000e+00> : vector<4x256xf32>
    %156 = tpu.matmul %3, %155, %cst_30 {dimension_numbers = #tpu.dot_dimension_numbers<[1], [0], [0], [1], [0, 0, 1, 1], [], []>} : vector<4x8xf32>, vector<8x256xf32>, vector<4x256xf32> -> vector<4x256xf32>
    %157 = vector.broadcast %4 : vector<4x1xf32> to vector<4x256xf32>
    %158 = arith.addf %156, %157 : vector<4x256xf32>
    %c1_31 = arith.constant 1 : index
    %c0_32 = arith.constant 0 : index
    %c0_33 = arith.constant 0 : index
    %159 = vector.load %arg7[%c1_31, %c0_32, %c0_33] : memref<2x4x256xf32, #tpu.memory_space<vmem>>, vector<1x4x256xf32>
    %160 = vector.shape_cast %159 : vector<1x4x256xf32> to vector<4x256xf32>
    %161 = vector.shape_cast %158 : vector<4x256xf32> to vector<1x4x256xf32>
    tpu.vector_store %arg7[%c1_31, %c0_32, %c0_33], %161 {strides = array<i32>} : memref<2x4x256xf32, #tpu.memory_space<vmem>>, vector<1x4x256xf32>,
    return
  }
  func.func @transform_0(%arg0: i32) -> (i32, i32, i32) {
    %c0_i32 = arith.constant 0 : i32
    %c0_i32_0 = arith.constant 0 : i32
    %c0_i32_1 = arith.constant 0 : i32
    return %arg0, %c0_i32, %c0_i32_0 : i32, i32, i32
  }
  func.func @transform_1(%arg0: i32) -> (i32, i32) {
    %c0_i32 = arith.constant 0 : i32
    %c0_i32_0 = arith.constant 0 : i32
    %c0_i32_1 = arith.constant 0 : i32
    return %c0_i32, %c0_i32_0 : i32, i32
  }
  func.func @transform_2(%arg0: i32) -> (i32, i32) {
    %c0_i32 = arith.constant 0 : i32
    %c0_i32_0 = arith.constant 0 : i32
    %c0_i32_1 = arith.constant 0 : i32
    return %c0_i32, %c0_i32_0 : i32, i32
  }
  func.func @transform_3(%arg0: i32) -> (i32, i32) {
    %c0_i32 = arith.constant 0 : i32
    %c0_i32_0 = arith.constant 0 : i32
    %c0_i32_1 = arith.constant 0 : i32
    return %c0_i32, %c0_i32_0 : i32, i32
  }
  func.func @transform_4(%arg0: i32) -> (i32, i32) {
    %c0_i32 = arith.constant 0 : i32
    %c0_i32_0 = arith.constant 0 : i32
    %c0_i32_1 = arith.constant 0 : i32
    return %c0_i32, %c0_i32_0 : i32, i32
  }
  func.func @transform_5(%arg0: i32) -> (i32, i32) {
    %c0_i32 = arith.constant 0 : i32
    %c0_i32_0 = arith.constant 0 : i32
    %c0_i32_1 = arith.constant 0 : i32
    return %c0_i32, %c0_i32_0 : i32, i32
  }
  func.func @transform_6(%arg0: i32) -> (i32, i32, i32) {
    %c0_i32 = arith.constant 0 : i32
    %c0_i32_0 = arith.constant 0 : i32
    %c0_i32_1 = arith.constant 0 : i32
    return %arg0, %c0_i32, %c0_i32_0 : i32, i32, i32
  }
}

</mosaic_0001>

<llo_original>
// kernel: tpu_custom_call.1
$region0: #{tpu_custom_call.1}
  #allocation0 [shape = 'u32[]', space=smem, size = 0x4, offset = 0x4, fixed_abs, tag = 'smem constant byte address 0x4 - core index']
  #allocation1 [shape = 'u32[144,128]{1,0:T(1,128)}', space=vmem, size = 0x12000, scoped, tag = 'internal scratch']
  %s0 = inlined_call_operand.vmem [shape: f32[2,4,256], index: 0, kind: input, shape index: {}]
  %s1 = inlined_call_operand.vmem [shape: f32[8,4], index: 1, kind: input, shape index: {}]
  %s2 = inlined_call_operand.vmem [shape: f32[8,1], index: 2, kind: input, shape index: {}]
  %s3 = inlined_call_operand.vmem [shape: f32[8,9], index: 3, kind: input, shape index: {}]
  %s4 = inlined_call_operand.vmem [shape: f32[4,8], index: 4, kind: input, shape index: {}]
  %s5 = inlined_call_operand.vmem [shape: f32[4,1], index: 5, kind: input, shape index: {}]
  %s6 = inlined_call_operand.hbm [shape: f32[2,4,256], index: 6, kind: output, shape index: {}]
  %s7 = sld [smem:[#allocation0]]
  $region34: #{tpu_custom_call.1} parent=0
    _
  %s9 = ssub.s32 1, %s7
  %s10 = scalar_select 0, %s9, %s7
  $region1: #{tpu_custom_call.1} parent=0
    #allocation2 [shape = 'u8[8192]{0}', space=vmem, size = 0x2000, scoped, tag = 'output window, operand 0, single buffered']
    #allocation3 [shape = 's32[1]{0}', space=sflag, size = 0x4, scoped, tag = 'scoped memory for tpu_custom_call.1']
    %11 = vsyncpa [#allocation3], 0
    // Predicated region
    $region2: #{tpu_custom_call.1} parent=1 // pred_check
      _
    $region3: #{tpu_custom_call.1} parent=1 // pred_check_branch
      %13 = sbr.rel (0) target = $region5
    $region4: #{tpu_custom_call.1} parent=1 // pred_region
      _
    $region5: #{tpu_custom_call.1} parent=1 // pred_fallthru
      _
    // Predicated region
    $region6: #{tpu_custom_call.1} parent=1 // pred_check
      _
    $region7: #{tpu_custom_call.1} parent=1 // pred_check_branch
      %15 = sbr.rel (0) target = $region9
    $region8: #{tpu_custom_call.1} parent=1 // pred_region
      _
    $region9: #{tpu_custom_call.1} parent=1 // pred_fallthru
      _
    // Predicated region
    $region10: #{tpu_custom_call.1} parent=1 // pred_check
      _
    $region11: #{tpu_custom_call.1} parent=1 // pred_check_branch
      %17 = sbr.rel (0) target = $region13
    $region12: #{tpu_custom_call.1} parent=1 // pred_region
      _
    $region13: #{tpu_custom_call.1} parent=1 // pred_fallthru
      _
    // Predicated region
    $region14: #{tpu_custom_call.1} parent=1 // pred_check
      _
    $region15: #{tpu_custom_call.1} parent=1 // pred_check_branch
      %19 = sbr.rel (0) target = $region17
    $region16: #{tpu_custom_call.1} parent=1 // pred_region
      _
    $region17: #{tpu_custom_call.1} parent=1 // pred_fallthru
      _
    // Predicated region
    $region18: #{tpu_custom_call.1} parent=1 // pred_check
      _
    $region19: #{tpu_custom_call.1} parent=1 // pred_check_branch
      %21 = sbr.rel (0) target = $region21
    $region20: #{tpu_custom_call.1} parent=1 // pred_region
      _
    $region21: #{tpu_custom_call.1} parent=1 // pred_fallthru
      _
    // Predicated region
    $region22: #{tpu_custom_call.1} parent=1 // pred_check
      _
    $region23: #{tpu_custom_call.1} parent=1 // pred_check_branch
      %23 = sbr.rel (0) target = $region25
    $region24: #{tpu_custom_call.1} parent=1 // pred_region
      _
    $region25: #{tpu_custom_call.1} parent=1 // pred_fallthru
      _
    %v24 = vld [vmem:[%s1] sm:$0xff]
    %v25 = vld [vmem:[%s2] sm:$0xff]
    %v26 = vld [vmem:[%s3] sm:$0xff]
    %v27 = vld [vmem:[%s4] sm:$0xf]
    %v28 = vld [vmem:[%s5] sm:$0xf]
    %v29 = vlaneseq
    %v30 = vand.u32 %v29, 127
    %v31 = vadd.s32 %v30, 128
    %v32 = vcvt.s32.f32 %v30
    %v33 = vcvt.s32.f32 %v31
    %v34 = vrcp.pop 16.0
    %v35 = vmul.f32 %v32, %v34
    %v36 = vmul.f32 %v33, %v34
    %v37 = vfloor.f32 %v35
    %v38 = vfloor.f32 %v36
    %v39 = vmul.f32 %v37, 16.0
    %v40 = vmul.f32 %v38, 16.0
    %v41 = vsub.f32 %v32, %v39
    %v42 = vsub.f32 %v33, %v40
    %vm43 = vcmp.ge.f32.partialorder %v41, 0.5
    %vm44 = vcmp.ge.f32.partialorder %v42, 0.5
    %v45 = vsel %vm43, 1.0, 0.0
    %v46 = vsel %vm44, 1.0, 0.0
    %vm47 = vcmp.le.f32.partialorder %v41, 14.5
    %vm48 = vcmp.le.f32.partialorder %v42, 14.5
    %v49 = vsel %vm47, 1.0, 0.0
    %v50 = vsel %vm48, 1.0, 0.0
    %v51 = vld [vmem:[%s0] sm:$0xff]
    %53 = vset.pattern.permute.xlu0 0
    %54 = vperm.xlu0 %53, %v25
    %v55 = vpop.permute.xlu0 %54
    %v58 = vcombine.high %v51, %v51
    %vm59 = vcmask 31744
    %v61 = vsel %vm59, %v24, 0
    %vm63 = vcmask 1043456
    %v64 = vsel %vm63, %v51, 0
    %v66 = vsel %vm63, %v58, 0
    %68 = vmatprep.subr.mxu0 0.0
    %69 = vmatpush1.msra.mxu0 0.0
    %70 = vmatprep.subr.mxu0 0.0
    %71 = vmatpush1.msra.mxu0 0.0
    %72 = vmatprep.subr.mxu0 0.0
    %73 = vmatpush1.msra.mxu0 0.0
    %74 = vmatprep.subr.mxu0 0.0
    %75 = vmatpush1.msra.mxu0 0.0
    %76 = vmatprep.subr.mxu0 0.0
    %77 = vmatpush1.msra.mxu0 0.0
    %78 = vmatprep.subr.mxu0 0.0
    %79 = vmatpush1.msra.mxu0 0.0
    %80 = vmatprep.subr.mxu0 0.0
    %81 = vmatpush1.msra.mxu0 0.0
    %82 = vmatprep.subr.mxu0 0.0
    %83 = vmatpush1.msra.mxu0 0.0
    %84 = vmatprep.subr.mxu0 0.0
    %85 = vmatpush1.msra.mxu0 0.0
    %86 = vmatprep.subr.mxu0 0.0
    %87 = vmatpush1.msra.mxu0 0.0
    %88 = vmatprep.subr.mxu0 0.0
    %89 = vmatpush1.msra.mxu0 0.0
    %90 = vmatprep.subr.mxu0 0.0
    %91 = vmatpush1.msra.mxu0 0.0
    %92 = vmatprep.subr.mxu0 0.0
    %93 = vmatpush1.msra.mxu0 0.0
    %94 = vmatprep.subr.mxu0 0.0
    %95 = vmatpush1.msra.mxu0 0.0
    %96 = vmatprep.subr.mxu0 0.0
    %97 = vmatpush1.msra.mxu0 0.0
    %98 = vmatprep.subr.mxu0 %v66
    %99 = vmatpush1.msra.mxu0 %v64
    %100 = vmatprep.subr.mxu0 0.0
    %101 = vmatpush2.msra.mxu0 0.0
    %102 = vmatprep.subr.mxu0 0.0
    %103 = vmatpush2.msra.mxu0 0.0
    %104 = vmatprep.subr.mxu0 0.0
    %105 = vmatpush2.msra.mxu0 0.0
    %106 = vmatprep.subr.mxu0 0.0
    %107 = vmatpush2.msra.mxu0 0.0
    %108 = vmatprep.subr.mxu0 0.0
    %109 = vmatpush2.msra.mxu0 0.0
    %110 = vmatprep.subr.mxu0 0.0
    %111 = vmatpush2.msra.mxu0 0.0
    %112 = vmatprep.subr.mxu0 0.0
    %113 = vmatpush2.msra.mxu0 0.0
    %114 = vmatprep.subr.mxu0 0.0
    %115 = vmatpush2.msra.mxu0 0.0
    %116 = vmatprep.subr.mxu0 0.0
    %117 = vmatpush2.msra.mxu0 0.0
    %118 = vmatprep.subr.mxu0 0.0
    %119 = vmatpush2.msra.mxu0 0.0
    %120 = vmatprep.subr.mxu0 0.0
    %121 = vmatpush2.msra.mxu0 0.0
    %122 = vmatprep.subr.mxu0 0.0
    %123 = vmatpush2.msra.mxu0 0.0
    %124 = vmatprep.subr.mxu0 0.0
    %125 = vmatpush2.msra.mxu0 0.0
    %126 = vmatprep.subr.mxu0 0.0
    %127 = vmatpush2.msra.mxu0 0.0
    %128 = vmatprep.subr.mxu0 0.0
    %129 = vmatpush2.msra.mxu0 0.0
    %130 = vmatprep.subr.mxu0 0.0
    %131 = vmatpush2.msra.mxu0 0.0
    %132 = vmatprep.mubr.f32.mxu0 0.0
    %133 = vmatmul.mubr.f32.gmra.mxu0 %v61
    %v134 = vpop.f32.mrf.mxu0
    %v135 = vadd.f32 %v55, %v134
    %v136 = vpop.f32.mrf.mxu0
    %v137 = vadd.f32 %v55, %v136
    %138 = vdwg.mxu0
    %v139 = vmax.f32 %v135, 0.0
    %v140 = vmax.f32 %v137, 0.0
    %142 = vset.pattern.permute.xlu0 4
    %143 = vperm.xlu0 %142, %v26
    %v144 = vpop.permute.xlu0 %143
    %v146 = vmul.f32 %v139, %v144
    %v147 = vmul.f32 %v140, %v144
    %150 = vrot.lane.b32.xlu0 %v45, 111
    %v151 = vpop.permute.xlu0 %150
    %152 = vrot.lane.b32.xlu0 %v46, 111
    %v153 = vpop.permute.xlu0 %152
    %vm154 = vcmask 908288
    %v155 = vsel %vm154, %v151, %v153
    %v159 = vmul.f32 %v151, 0.0
    %v160 = vmul.f32 %v139, %v155
    %v161 = vmul.f32 %v140, %v153
    %162 = vset.pattern.permute.xlu0 0
    %163 = vperm.xlu0 %162, %v26
    %v164 = vpop.permute.xlu0 %163
    %v166 = vmul.f32 %v159, %v164
    %v167 = vmul.f32 %v160, %v164
    %v168 = vmul.f32 %v161, %v164
    %172 = vrot.lane.b32.xlu0 %v166, 17
    %v173 = vpop.permute.xlu0 %172
    %174 = vrot.lane.b32.xlu0 %v167, 17
    %v175 = vpop.permute.xlu0 %174
    %176 = vrot.lane.b32.xlu0 %v168, 17
    %v177 = vpop.permute.xlu0 %176
    %vm178 = vcmask 138240
    %v179 = vsel %vm178, %v173, %v175
    %v180 = vsel %vm178, %v175, %v177
    %v183 = vadd.f32 %v146, %v179
    %v184 = vadd.f32 %v147, %v180
    %185 = vset.pattern.permute.xlu0 1
    %186 = vperm.xlu0 %185, %v26
    %v187 = vpop.permute.xlu0 %186
    %v189 = vmul.f32 %v187, 0.0
    %v190 = vmul.f32 %v139, %v187
    %v191 = vmul.f32 %v140, %v187
    %195 = vrot.lane.b32.xlu0 %v189, 16
    %v196 = vpop.permute.xlu0 %195
    %197 = vrot.lane.b32.xlu0 %v190, 16
    %v198 = vpop.permute.xlu0 %197
    %199 = vrot.lane.b32.xlu0 %v191, 16
    %v200 = vpop.permute.xlu0 %199
    %vm201 = vcmask 130048
    %v202 = vsel %vm201, %v196, %v198
    %v203 = vsel %vm201, %v198, %v200
    %v206 = vadd.f32 %v183, %v202
    %v207 = vadd.f32 %v184, %v203
    %210 = vrot.lane.b32.xlu0 %v49, 113
    %v211 = vpop.permute.xlu0 %210
    %212 = vrot.lane.b32.xlu0 %v50, 113
    %v213 = vpop.permute.xlu0 %212
    %vm214 = vcmask 924672
    %v215 = vsel %vm214, %v211, %v213
    %v219 = vmul.f32 %v211, 0.0
    %v220 = vmul.f32 %v139, %v215
    %v221 = vmul.f32 %v140, %v213
    %222 = vset.pattern.permute.xlu0 2
    %223 = vperm.xlu0 %222, %v26
    %v224 = vpop.permute.xlu0 %223
    %v226 = vmul.f32 %v219, %v224
    %v227 = vmul.f32 %v220, %v224
    %v228 = vmul.f32 %v221, %v224
    %232 = vrot.lane.b32.xlu0 %v226, 15
    %v233 = vpop.permute.xlu0 %232
    %234 = vrot.lane.b32.xlu0 %v227, 15
    %v235 = vpop.permute.xlu0 %234
    %236 = vrot.lane.b32.xlu0 %v228, 15
    %v237 = vpop.permute.xlu0 %236
    %vm238 = vcmask 121856
    %v239 = vsel %vm238, %v233, %v235
    %v240 = vsel %vm238, %v235, %v237
    %v243 = vadd.f32 %v206, %v239
    %v244 = vadd.f32 %v207, %v240
    %245 = vrot.lane.b32.xlu0 %v45, 127
    %v246 = vpop.permute.xlu0 %245
    %247 = vrot.lane.b32.xlu0 %v46, 127
    %v248 = vpop.permute.xlu0 %247
    %vm249 = vcmask 1039360
    %v250 = vsel %vm249, %v246, %v248
    %v254 = vmul.f32 %v246, 0.0
    %v255 = vmul.f32 %v139, %v250
    %v256 = vmul.f32 %v140, %v248
    %257 = vset.pattern.permute.xlu0 3
    %258 = vperm.xlu0 %257, %v26
    %v259 = vpop.permute.xlu0 %258
    %v261 = vmul.f32 %v254, %v259
    %v262 = vmul.f32 %v255, %v259
    %v263 = vmul.f32 %v256, %v259
    %267 = vrot.lane.b32.xlu0 %v261, 1
    %v268 = vpop.permute.xlu0 %267
    %269 = vrot.lane.b32.xlu0 %v262, 1
    %v270 = vpop.permute.xlu0 %269
    %271 = vrot.lane.b32.xlu0 %v263, 1
    %v272 = vpop.permute.xlu0 %271
    %vm273 = vcmask 7168
    %v274 = vsel %vm273, %v268, %v270
    %v275 = vsel %vm273, %v270, %v272
    %v278 = vadd.f32 %v243, %v274
    %v279 = vadd.f32 %v244, %v275
    %280 = vrot.lane.b32.xlu0 %v49, 1
    %v281 = vpop.permute.xlu0 %280
    %282 = vrot.lane.b32.xlu0 %v50, 1
    %v283 = vpop.permute.xlu0 %282
    %v284 = vsel %vm273, %v281, %v283
    %v288 = vmul.f32 %v139, %v281
    %v289 = vmul.f32 %v140, %v284
    %v290 = vmul.f32 %v283, 0.0
    %291 = vset.pattern.permute.xlu0 5
    %292 = vperm.xlu0 %291, %v26
    %v293 = vpop.permute.xlu0 %292
    %v295 = vmul.f32 %v288, %v293
    %v296 = vmul.f32 %v289, %v293
    %v297 = vmul.f32 %v290, %v293
    %301 = vrot.lane.b32.xlu0 %v295, 127
    %v302 = vpop.permute.xlu0 %301
    %303 = vrot.lane.b32.xlu0 %v296, 127
    %v304 = vpop.permute.xlu0 %303
    %305 = vrot.lane.b32.xlu0 %v297, 127
    %v306 = vpop.permute.xlu0 %305
    %v307 = vsel %vm249, %v302, %v304
    %v308 = vsel %vm249, %v304, %v306
    %v311 = vadd.f32 %v278, %v307
    %v312 = vadd.f32 %v279, %v308
    %313 = vrot.lane.b32.xlu0 %v45, 15
    %v314 = vpop.permute.xlu0 %313
    %315 = vrot.lane.b32.xlu0 %v46, 15
    %v316 = vpop.permute.xlu0 %315
    %v317 = vsel %vm238, %v314, %v316
    %v321 = vmul.f32 %v139, %v314
    %v322 = vmul.f32 %v140, %v317
    %v323 = vmul.f32 %v316, 0.0
    %324 = vset.pattern.permute.xlu0 6
    %325 = vperm.xlu0 %324, %v26
    %v326 = vpop.permute.xlu0 %325
    %v328 = vmul.f32 %v321, %v326
    %v329 = vmul.f32 %v322, %v326
    %v330 = vmul.f32 %v323, %v326
    %334 = vrot.lane.b32.xlu0 %v328, 113
    %v335 = vpop.permute.xlu0 %334
    %336 = vrot.lane.b32.xlu0 %v329, 113
    %v337 = vpop.permute.xlu0 %336
    %338 = vrot.lane.b32.xlu0 %v330, 113
    %v339 = vpop.permute.xlu0 %338
    %v340 = vsel %vm214, %v335, %v337
    %v341 = vsel %vm214, %v337, %v339
    %v344 = vadd.f32 %v311, %v340
    %v345 = vadd.f32 %v312, %v341
    %346 = vset.pattern.permute.xlu0 7
    %347 = vperm.xlu0 %346, %v26
    %v348 = vpop.permute.xlu0 %347
    %v350 = vmul.f32 %v139, %v348
    %v351 = vmul.f32 %v140, %v348
    %v352 = vmul.f32 %v348, 0.0
    %356 = vrot.lane.b32.xlu0 %v350, 112
    %v357 = vpop.permute.xlu0 %356
    %358 = vrot.lane.b32.xlu0 %v351, 112
    %v359 = vpop.permute.xlu0 %358
    %360 = vrot.lane.b32.xlu0 %v352, 112
    %v361 = vpop.permute.xlu0 %360
    %vm362 = vcmask 916480
    %v363 = vsel %vm362, %v357, %v359
    %v364 = vsel %vm362, %v359, %v361
    %v367 = vadd.f32 %v344, %v363
    %v368 = vadd.f32 %v345, %v364
    %369 = vrot.lane.b32.xlu0 %v49, 17
    %v370 = vpop.permute.xlu0 %369
    %371 = vrot.lane.b32.xlu0 %v50, 17
    %v372 = vpop.permute.xlu0 %371
    %v373 = vsel %vm178, %v370, %v372
    %v377 = vmul.f32 %v139, %v370
    %v378 = vmul.f32 %v140, %v373
    %v379 = vmul.f32 %v372, 0.0
    %380 = vset.pattern.permute.xlu0 8
    %381 = vperm.xlu0 %380, %v26
    %v382 = vpop.permute.xlu0 %381
    %v384 = vmul.f32 %v377, %v382
    %v385 = vmul.f32 %v378, %v382
    %v386 = vmul.f32 %v379, %v382
    %390 = vrot.lane.b32.xlu0 %v384, 111
    %v391 = vpop.permute.xlu0 %390
    %392 = vrot.lane.b32.xlu0 %v385, 111
    %v393 = vpop.permute.xlu0 %392
    %394 = vrot.lane.b32.xlu0 %v386, 111
    %v395 = vpop.permute.xlu0 %394
    %v396 = vsel %vm154, %v391, %v393
    %v397 = vsel %vm154, %v393, %v395
    %v400 = vadd.f32 %v367, %v396
    %v401 = vadd.f32 %v368, %v397
    %403 = vset.pattern.permute.xlu0 0
    %404 = vperm.xlu0 %403, %v28
    %v405 = vpop.permute.xlu0 %404
    %vm407 = vcmask 64512
    %v409 = vsel %vm407, %v27, 0
    %411 = vmatprep.subr.mxu0 0.0
    %412 = vmatpush1.msra.mxu0 0.0
    %413 = vmatprep.subr.mxu0 0.0
    %414 = vmatpush1.msra.mxu0 0.0
    %415 = vmatprep.subr.mxu0 0.0
    %416 = vmatpush1.msra.mxu0 0.0
    %417 = vmatprep.subr.mxu0 0.0
    %418 = vmatpush1.msra.mxu0 0.0
    %419 = vmatprep.subr.mxu0 0.0
    %420 = vmatpush1.msra.mxu0 0.0
    %421 = vmatprep.subr.mxu0 0.0
    %422 = vmatpush1.msra.mxu0 0.0
    %423 = vmatprep.subr.mxu0 0.0
    %424 = vmatpush1.msra.mxu0 0.0
    %425 = vmatprep.subr.mxu0 0.0
    %426 = vmatpush1.msra.mxu0 0.0
    %427 = vmatprep.subr.mxu0 0.0
    %428 = vmatpush1.msra.mxu0 0.0
    %429 = vmatprep.subr.mxu0 0.0
    %430 = vmatpush1.msra.mxu0 0.0
    %431 = vmatprep.subr.mxu0 0.0
    %432 = vmatpush1.msra.mxu0 0.0
    %433 = vmatprep.subr.mxu0 0.0
    %434 = vmatpush1.msra.mxu0 0.0
    %435 = vmatprep.subr.mxu0 0.0
    %436 = vmatpush1.msra.mxu0 0.0
    %437 = vmatprep.subr.mxu0 0.0
    %438 = vmatpush1.msra.mxu0 0.0
    %439 = vmatprep.subr.mxu0 0.0
    %440 = vmatpush1.msra.mxu0 0.0
    %441 = vmatprep.subr.mxu0 %v401
    %442 = vmatpush1.msra.mxu0 %v400
    %443 = vmatprep.subr.mxu0 0.0
    %444 = vmatpush2.msra.mxu0 0.0
    %445 = vmatprep.subr.mxu0 0.0
    %446 = vmatpush2.msra.mxu0 0.0
    %447 = vmatprep.subr.mxu0 0.0
    %448 = vmatpush2.msra.mxu0 0.0
    %449 = vmatprep.subr.mxu0 0.0
    %450 = vmatpush2.msra.mxu0 0.0
    %451 = vmatprep.subr.mxu0 0.0
    %452 = vmatpush2.msra.mxu0 0.0
    %453 = vmatprep.subr.mxu0 0.0
    %454 = vmatpush2.msra.mxu0 0.0
    %455 = vmatprep.subr.mxu0 0.0
    %456 = vmatpush2.msra.mxu0 0.0
    %457 = vmatprep.subr.mxu0 0.0
    %458 = vmatpush2.msra.mxu0 0.0
    %459 = vmatprep.subr.mxu0 0.0
    %460 = vmatpush2.msra.mxu0 0.0
    %461 = vmatprep.subr.mxu0 0.0
    %462 = vmatpush2.msra.mxu0 0.0
    %463 = vmatprep.subr.mxu0 0.0
    %464 = vmatpush2.msra.mxu0 0.0
    %465 = vmatprep.subr.mxu0 0.0
    %466 = vmatpush2.msra.mxu0 0.0
    %467 = vmatprep.subr.mxu0 0.0
    %468 = vmatpush2.msra.mxu0 0.0
    %469 = vmatprep.subr.mxu0 0.0
    %470 = vmatpush2.msra.mxu0 0.0
    %471 = vmatprep.subr.mxu0 0.0
    %472 = vmatpush2.msra.mxu0 0.0
    %473 = vmatprep.subr.mxu0 0.0
    %474 = vmatpush2.msra.mxu0 0.0
    %475 = vmatprep.mubr.f32.mxu0 0.0
    %476 = vmatmul.mubr.f32.gmra.mxu0 %v409
    %v477 = vpop.f32.mrf.mxu0
    %v478 = vadd.f32 %v405, %v477
    %v479 = vpop.f32.mrf.mxu0
    %v480 = vadd.f32 %v405, %v479
    %481 = vdwg.mxu0
    %v484 = vcombine.low %v478, %v480
    %486 = vst [vmem:[#allocation2] sm:$0xff] %v484
    %s487 = scalar_lea.vmem %s0, 8
    %v488 = vld [vmem:[%s487] sm:$0xff]
    %v490 = vcombine.high %v488, %v488
    %v491 = vsel %vm63, %v488, 0
    %v493 = vsel %vm63, %v490, 0
    %495 = vmatprep.subr.mxu0 0.0
    %496 = vmatpush1.msra.mxu0 0.0
    %497 = vmatprep.subr.mxu0 0.0
    %498 = vmatpush1.msra.mxu0 0.0
    %499 = vmatprep.subr.mxu0 0.0
    %500 = vmatpush1.msra.mxu0 0.0
    %501 = vmatprep.subr.mxu0 0.0
    %502 = vmatpush1.msra.mxu0 0.0
    %503 = vmatprep.subr.mxu0 0.0
    %504 = vmatpush1.msra.mxu0 0.0
    %505 = vmatprep.subr.mxu0 0.0
    %506 = vmatpush1.msra.mxu0 0.0
    %507 = vmatprep.subr.mxu0 0.0
    %508 = vmatpush1.msra.mxu0 0.0
    %509 = vmatprep.subr.mxu0 0.0
    %510 = vmatpush1.msra.mxu0 0.0
    %511 = vmatprep.subr.mxu0 0.0
    %512 = vmatpush1.msra.mxu0 0.0
    %513 = vmatprep.subr.mxu0 0.0
    %514 = vmatpush1.msra.mxu0 0.0
    %515 = vmatprep.subr.mxu0 0.0
    %516 = vmatpush1.msra.mxu0 0.0
    %517 = vmatprep.subr.mxu0 0.0
    %518 = vmatpush1.msra.mxu0 0.0
    %519 = vmatprep.subr.mxu0 0.0
    %520 = vmatpush1.msra.mxu0 0.0
    %521 = vmatprep.subr.mxu0 0.0
    %522 = vmatpush1.msra.mxu0 0.0
    %523 = vmatprep.subr.mxu0 0.0
    %524 = vmatpush1.msra.mxu0 0.0
    %525 = vmatprep.subr.mxu0 %v493
    %526 = vmatpush1.msra.mxu0 %v491
    %527 = vmatprep.subr.mxu0 0.0
    %528 = vmatpush2.msra.mxu0 0.0
    %529 = vmatprep.subr.mxu0 0.0
    %530 = vmatpush2.msra.mxu0 0.0
    %531 = vmatprep.subr.mxu0 0.0
    %532 = vmatpush2.msra.mxu0 0.0
    %533 = vmatprep.subr.mxu0 0.0
    %534 = vmatpush2.msra.mxu0 0.0
    %535 = vmatprep.subr.mxu0 0.0
    %536 = vmatpush2.msra.mxu0 0.0
    %537 = vmatprep.subr.mxu0 0.0
    %538 = vmatpush2.msra.mxu0 0.0
    %539 = vmatprep.subr.mxu0 0.0
    %540 = vmatpush2.msra.mxu0 0.0
    %541 = vmatprep.subr.mxu0 0.0
    %542 = vmatpush2.msra.mxu0 0.0
    %543 = vmatprep.subr.mxu0 0.0
    %544 = vmatpush2.msra.mxu0 0.0
    %545 = vmatprep.subr.mxu0 0.0
    %546 = vmatpush2.msra.mxu0 0.0
    %547 = vmatprep.subr.mxu0 0.0
    %548 = vmatpush2.msra.mxu0 0.0
    %549 = vmatprep.subr.mxu0 0.0
    %550 = vmatpush2.msra.mxu0 0.0
    %551 = vmatprep.subr.mxu0 0.0
    %552 = vmatpush2.msra.mxu0 0.0
    %553 = vmatprep.subr.mxu0 0.0
    %554 = vmatpush2.msra.mxu0 0.0
    %555 = vmatprep.subr.mxu0 0.0
    %556 = vmatpush2.msra.mxu0 0.0
    %557 = vmatprep.subr.mxu0 0.0
    %558 = vmatpush2.msra.mxu0 0.0
    %559 = vmatprep.mubr.f32.mxu0 0.0
    %560 = vmatmul.mubr.f32.gmra.mxu0 %v61
    %v561 = vpop.f32.mrf.mxu0
    %v562 = vadd.f32 %v55, %v561
    %v563 = vpop.f32.mrf.mxu0
    %v564 = vadd.f32 %v55, %v563
    %565 = vdwg.mxu0
    %v566 = vmax.f32 %v562, 0.0
    %v567 = vmax.f32 %v564, 0.0
    %v568 = vmul.f32 %v566, %v144
    %v569 = vmul.f32 %v567, %v144
    %v570 = vmul.f32 %v566, %v155
    %v571 = vmul.f32 %v567, %v153
    %v572 = vmul.f32 %v570, %v164
    %v573 = vmul.f32 %v571, %v164
    %576 = vrot.lane.b32.xlu0 %v572, 17
    %v577 = vpop.permute.xlu0 %576
    %578 = vrot.lane.b32.xlu0 %v573, 17
    %v579 = vpop.permute.xlu0 %578
    %v580 = vsel %vm178, %v173, %v577
    %v581 = vsel %vm178, %v577, %v579
    %v584 = vadd.f32 %v568, %v580
    %v585 = vadd.f32 %v569, %v581
    %v586 = vmul.f32 %v566, %v187
    %v587 = vmul.f32 %v567, %v187
    %590 = vrot.lane.b32.xlu0 %v586, 16
    %v591 = vpop.permute.xlu0 %590
    %592 = vrot.lane.b32.xlu0 %v587, 16
    %v593 = vpop.permute.xlu0 %592
    %v594 = vsel %vm201, %v196, %v591
    %v595 = vsel %vm201, %v591, %v593
    %v598 = vadd.f32 %v584, %v594
    %v599 = vadd.f32 %v585, %v595
    %v600 = vmul.f32 %v566, %v215
    %v601 = vmul.f32 %v567, %v213
    %v602 = vmul.f32 %v600, %v224
    %v603 = vmul.f32 %v601, %v224
    %606 = vrot.lane.b32.xlu0 %v602, 15
    %v607 = vpop.permute.xlu0 %606
    %608 = vrot.lane.b32.xlu0 %v603, 15
    %v609 = vpop.permute.xlu0 %608
    %v610 = vsel %vm238, %v233, %v607
    %v611 = vsel %vm238, %v607, %v609
    %v614 = vadd.f32 %v598, %v610
    %v615 = vadd.f32 %v599, %v611
    %v616 = vmul.f32 %v566, %v250
    %v617 = vmul.f32 %v567, %v248
    %v618 = vmul.f32 %v616, %v259
    %v619 = vmul.f32 %v617, %v259
    %622 = vrot.lane.b32.xlu0 %v618, 1
    %v623 = vpop.permute.xlu0 %622
    %624 = vrot.lane.b32.xlu0 %v619, 1
    %v625 = vpop.permute.xlu0 %624
    %v626 = vsel %vm273, %v268, %v623
    %v627 = vsel %vm273, %v623, %v625
    %v630 = vadd.f32 %v614, %v626
    %v631 = vadd.f32 %v615, %v627
    %v632 = vmul.f32 %v566, %v281
    %v633 = vmul.f32 %v567, %v284
    %v634 = vmul.f32 %v632, %v293
    %v635 = vmul.f32 %v633, %v293
    %638 = vrot.lane.b32.xlu0 %v634, 127
    %v639 = vpop.permute.xlu0 %638
    %640 = vrot.lane.b32.xlu0 %v635, 127
    %v641 = vpop.permute.xlu0 %640
    %v642 = vsel %vm249, %v639, %v641
    %v643 = vsel %vm249, %v641, %v306
    %v646 = vadd.f32 %v630, %v642
    %v647 = vadd.f32 %v631, %v643
    %v648 = vmul.f32 %v566, %v314
    %v649 = vmul.f32 %v567, %v317
    %v650 = vmul.f32 %v648, %v326
    %v651 = vmul.f32 %v649, %v326
    %654 = vrot.lane.b32.xlu0 %v650, 113
    %v655 = vpop.permute.xlu0 %654
    %656 = vrot.lane.b32.xlu0 %v651, 113
    %v657 = vpop.permute.xlu0 %656
    %v658 = vsel %vm214, %v655, %v657
    %v659 = vsel %vm214, %v657, %v339
    %v662 = vadd.f32 %v646, %v658
    %v663 = vadd.f32 %v647, %v659
    %v664 = vmul.f32 %v566, %v348
    %v665 = vmul.f32 %v567, %v348
    %668 = vrot.lane.b32.xlu0 %v664, 112
    %v669 = vpop.permute.xlu0 %668
    %670 = vrot.lane.b32.xlu0 %v665, 112
    %v671 = vpop.permute.xlu0 %670
    %v672 = vsel %vm362, %v669, %v671
    %v673 = vsel %vm362, %v671, %v361
    %v676 = vadd.f32 %v662, %v672
    %v677 = vadd.f32 %v663, %v673
    %v678 = vmul.f32 %v566, %v370
    %v679 = vmul.f32 %v567, %v373
    %v680 = vmul.f32 %v678, %v382
    %v681 = vmul.f32 %v679, %v382
    %684 = vrot.lane.b32.xlu0 %v680, 111
    %v685 = vpop.permute.xlu0 %684
    %686 = vrot.lane.b32.xlu0 %v681, 111
    %v687 = vpop.permute.xlu0 %686
    %v688 = vsel %vm154, %v685, %v687
    %v689 = vsel %vm154, %v687, %v395
    %v692 = vadd.f32 %v676, %v688
    %v693 = vadd.f32 %v677, %v689
    %694 = vmatprep.subr.mxu0 0.0
    %695 = vmatpush1.msra.mxu0 0.0
    %696 = vmatprep.subr.mxu0 0.0
    %697 = vmatpush1.msra.mxu0 0.0
    %698 = vmatprep.subr.mxu0 0.0
    %699 = vmatpush1.msra.mxu0 0.0
    %700 = vmatprep.subr.mxu0 0.0
    %701 = vmatpush1.msra.mxu0 0.0
    %702 = vmatprep.subr.mxu0 0.0
    %703 = vmatpush1.msra.mxu0 0.0
    %704 = vmatprep.subr.mxu0 0.0
    %705 = vmatpush1.msra.mxu0 0.0
    %706 = vmatprep.subr.mxu0 0.0
    %707 = vmatpush1.msra.mxu0 0.0
    %708 = vmatprep.subr.mxu0 0.0
    %709 = vmatpush1.msra.mxu0 0.0
    %710 = vmatprep.subr.mxu0 0.0
    %711 = vmatpush1.msra.mxu0 0.0
    %712 = vmatprep.subr.mxu0 0.0
    %713 = vmatpush1.msra.mxu0 0.0
    %714 = vmatprep.subr.mxu0 0.0
    %715 = vmatpush1.msra.mxu0 0.0
    %716 = vmatprep.subr.mxu0 0.0
    %717 = vmatpush1.msra.mxu0 0.0
    %718 = vmatprep.subr.mxu0 0.0
    %719 = vmatpush1.msra.mxu0 0.0
    %720 = vmatprep.subr.mxu0 0.0
    %721 = vmatpush1.msra.mxu0 0.0
    %722 = vmatprep.subr.mxu0 0.0
    %723 = vmatpush1.msra.mxu0 0.0
    %724 = vmatprep.subr.mxu0 %v693
    %725 = vmatpush1.msra.mxu0 %v692
    %726 = vmatprep.subr.mxu0 0.0
    %727 = vmatpush2.msra.mxu0 0.0
    %728 = vmatprep.subr.mxu0 0.0
    %729 = vmatpush2.msra.mxu0 0.0
    %730 = vmatprep.subr.mxu0 0.0
    %731 = vmatpush2.msra.mxu0 0.0
    %732 = vmatprep.subr.mxu0 0.0
    %733 = vmatpush2.msra.mxu0 0.0
    %734 = vmatprep.subr.mxu0 0.0
    %735 = vmatpush2.msra.mxu0 0.0
    %736 = vmatprep.subr.mxu0 0.0
    %737 = vmatpush2.msra.mxu0 0.0
    %738 = vmatprep.subr.mxu0 0.0
    %739 = vmatpush2.msra.mxu0 0.0
    %740 = vmatprep.subr.mxu0 0.0
    %741 = vmatpush2.msra.mxu0 0.0
    %742 = vmatprep.subr.mxu0 0.0
    %743 = vmatpush2.msra.mxu0 0.0
    %744 = vmatprep.subr.mxu0 0.0
    %745 = vmatpush2.msra.mxu0 0.0
    %746 = vmatprep.subr.mxu0 0.0
    %747 = vmatpush2.msra.mxu0 0.0
    %748 = vmatprep.subr.mxu0 0.0
    %749 = vmatpush2.msra.mxu0 0.0
    %750 = vmatprep.subr.mxu0 0.0
    %751 = vmatpush2.msra.mxu0 0.0
    %752 = vmatprep.subr.mxu0 0.0
    %753 = vmatpush2.msra.mxu0 0.0
    %754 = vmatprep.subr.mxu0 0.0
    %755 = vmatpush2.msra.mxu0 0.0
    %756 = vmatprep.subr.mxu0 0.0
    %757 = vmatpush2.msra.mxu0 0.0
    %758 = vmatprep.mubr.f32.mxu0 0.0
    %759 = vmatmul.mubr.f32.gmra.mxu0 %v409
    %v760 = vpop.f32.mrf.mxu0
    %v761 = vadd.f32 %v405, %v760
    %v762 = vpop.f32.mrf.mxu0
    %v763 = vadd.f32 %v405, %v762
    %764 = vdwg.mxu0
    %v767 = vcombine.low %v761, %v763
    %s769 = scalar_lea.vmem [#allocation2], 8
    %770 = vst [vmem:[%s769] sm:$0xff] %v767
    // Predicated region
    $region26: #{tpu_custom_call.1} parent=1 // pred_check
      _
    $region27: #{tpu_custom_call.1} parent=1 // pred_check_branch
      %772 = sbr.rel (0) target = $region29
    $region28: #{tpu_custom_call.1} parent=1 // pred_region
      %s774 = ssub.s32 256, 256
      %775 = vsyncadd [#allocation3], %s774
      %s776 = sshll.u32 [#allocation2], 4
      %s777 = int_to_ptr.vmem [resolvable:$true] %s776
      %782 = dma.vmem_to_hbm [thread:$0]  %s777, 256, %s6, [#allocation3], 128, 128, 8
    $region29: #{tpu_custom_call.1} parent=1 // pred_fallthru
      _
    // Predicated region
    $region30: #{tpu_custom_call.1} parent=1 // pred_check
      _
    $region31: #{tpu_custom_call.1} parent=1 // pred_check_branch
      %784 = sbr.rel (0) target = $region33
    $region32: #{tpu_custom_call.1} parent=1 // pred_region
      %785 = dma.done [#allocation3], 256
    $region33: #{tpu_custom_call.1} parent=1 // pred_fallthru
      _
    %786 = vsyncpa [#allocation3], 1

</llo_original>
